<compile_context>
chip_gen: v6e
topology: v6e:2x2x1
jax: 0.10.0
libtpu: 0.0.40
codegen_flags: <defaults>
</compile_context>

<pallas_src>
import jax
import jax.numpy as jnp
from jax.experimental import pallas as pl
from jax.experimental.pallas import tpu as pltpu


def _round_up(x: int, m: int) -> int:
    return (x + m - 1) // m * m


def _make_router_kernel(num_experts: int, num_tokens: int):
    """num_experts / num_tokens are the *unpadded* E and T."""

    def kernel(x_ref, w_ref, probs_ref, z2_ref):
        tm = x_ref.shape[0]
        e_pad = w_ref.shape[1]

        # In-kernel bf16 cast of the activations (HBM read stays the native
        # f32 tile; the cast is VPU filler under DMA slack).
        x = x_ref[...].astype(jnp.bfloat16)     # (TM, D)
        w = w_ref[...]                          # (D, E_pad) bf16, resident

        # Router logits on the MXU, f32 accumulation.
        logits = jnp.dot(x, w, preferred_element_type=jnp.float32)  # (TM, E_pad)

        # Mask padded expert columns (loop-invariant (1, E_pad) compare,
        # broadcast in the where) so they contribute to neither the softmax
        # nor the z-loss.  Skipped when E is already lane-aligned.
        if num_experts < e_pad:
            col = jax.lax.broadcasted_iota(jnp.int32, (1, e_pad), 1)
            logits = jnp.where(col < num_experts, logits, -1e30)

        # Numerically stable softmax over experts; EXACT normalization
        # (approx reciprocal previously failed the parity check).
        m = jnp.max(logits, axis=-1, keepdims=True)      # (TM, 1)
        e = jnp.exp(logits - m)                          # (TM, E_pad)
        s = jnp.sum(e, axis=-1, keepdims=True)           # (TM, 1)
        probs_ref[...] = (e / s).astype(probs_ref.dtype)

        # router_z_loss: per-token logsumexp(logits)^2, masked for padded token
        # rows of a ragged last tile, reduced to a single per-tile partial sum.
        log_z = m + jnp.log(s)                           # (TM, 1)
        row = jax.lax.broadcasted_iota(jnp.int32, (tm, 1), 0)
        global_row = pl.program_id(0) * tm + row
        z2 = jnp.where(global_row < num_tokens, log_z * log_z, 0.0)
        partial = jnp.sum(z2, keepdims=True)             # (1, 1)

        # Lane-dense (8, 128) store: partial sum in element [0, 0], zeros
        # elsewhere (summed in the wrapper).  One unmasked vreg store per tile.
        ri = jax.lax.broadcasted_iota(jnp.int32, (8, 128), 0)
        ci = jax.lax.broadcasted_iota(jnp.int32, (8, 128), 1)
        z2_ref[...] = jnp.where((ri == 0) & (ci == 0), partial, 0.0)

    return kernel


def sparse_router_forward(token_inputs: jax.Array,
                          w_gate: jax.Array,
                          expert_capacity: int,
                          *,
                          tm: int = 1024,
                          probs_store_dtype=jnp.bfloat16) -> dict:
    """Pallas implementation of SparseRouter.forward.

    token_inputs: [B, N, D] float32
    w_gate:       [D, E]    float32
    """
    B, N, D = token_inputs.shape
    D2, E = w_gate.shape
    assert D == D2
    T = B * N

    LANES = 128
    SUB = 16                                   # bf16 (16, 128) sublane packing
    E_pad = _round_up(E, LANES)                # lane-dense outputs
    TM = min(_round_up(tm, SUB), _round_up(T, SUB))
    num_tiles = pl.cdiv(T, TM)

    # Activations: free reshape only, no cast, no pad (ragged last tile is
    # handled by Pallas masking; garbage rows are masked out of the z-loss and
    # sliced off the probs below).
    x = token_inputs.reshape(T, D)

    # Weight is tiny (D x E): cast/pad it in the wrapper.
    w = w_gate.astype(jnp.bfloat16)
    if E_pad != E:
        w = jnp.pad(w, ((0, 0), (0, E_pad - E)))

    kernel = _make_router_kernel(E, T)

    probs_bytes = jnp.dtype(probs_store_dtype).itemsize
    cost = pl.CostEstimate(
        flops=2 * T * D * E_pad,
        transcendentals=T * E_pad,
        bytes_accessed=(T * D * 4                       # x (f32 read)
                        + D * E_pad * 2                 # resident bf16 weight
                        + T * E_pad * probs_bytes       # probs writeback
                        + num_tiles * 8 * 128 * 4),     # per-tile z^2 partials
    )

    probs_p, z2 = pl.pallas_call(
        kernel,
        out_shape=(
            jax.ShapeDtypeStruct((T, E_pad), probs_store_dtype),
            jax.ShapeDtypeStruct((8 * num_tiles, 128), jnp.float32),
        ),
        grid_spec=pltpu.PrefetchScalarGridSpec(
            num_scalar_prefetch=0,
            grid=(num_tiles,),
            in_specs=[
                pl.BlockSpec((TM, D), lambda i: (i, 0)),      # f32 token tile
                pl.BlockSpec((D, E_pad), lambda i: (0, 0)),   # resident weight
            ],
            out_specs=(
                pl.BlockSpec((TM, E_pad), lambda i: (i, 0)),  # bf16 probs
                pl.BlockSpec((8, 128), lambda i: (i, 0)),     # per-tile z^2 sum
            ),
        ),
        compiler_params=pltpu.CompilerParams(
            dimension_semantics=("parallel",),
            # TM=1024, D=4096: ~2 x 16 MiB f32 x-tiles + outputs + weight
            # stays under 48 MiB -> safe on v7x (64 MiB/TC) and v5e/v6e.
            vmem_limit_bytes=48 * 1024 * 1024,
        ),
        cost_estimate=cost,
    )(x, w)

    router_probs = probs_p[:, :E].astype(jnp.float32).reshape(B, N, E)
    router_z_loss = jnp.sum(z2) / T

    # TODO(synk): `compute_routing_instructions` is abstract in the base
    # SparseRouter (only defined in subclasses); return its inputs instead.
    return {
        "router_probs": router_probs,
        "expert_capacity": expert_capacity,
        "router_z_loss": router_z_loss,
    }


if __name__ == "__main__":
    # Small shapes consistent with the module: batch=2, seq=8, dim=32, experts=8.
    B, N, D, E = 2, 8, 32, 8
    expert_capacity = 4

    key = jax.random.PRNGKey(0)
    kx, kw = jax.random.split(key)
    token_inputs = jax.random.normal(kx, (B, N, D), dtype=jnp.float32)
    # Deterministic "randn" init for w_gate (shape: dim x num_experts).
    w_gate = jax.random.normal(kw, (D, E), dtype=jnp.float32)

    out = sparse_router_forward(token_inputs, w_gate, expert_capacity)
    jax.block_until_ready(out["router_probs"])
    jax.block_until_ready(out["router_z_loss"])

    # Plain-JAX reference using the same bf16-rounded operands the kernel feeds
    # to the MXU (accumulation / softmax in f32 in both paths).
    x_bf = token_inputs.astype(jnp.bfloat16).astype(jnp.float32)
    w_bf = w_gate.astype(jnp.bfloat16).astype(jnp.float32)
    logits_ref = jnp.einsum("bnd,de->bne", x_bf, w_bf,
                            precision=jax.lax.Precision.HIGHEST)
    probs_ref = jax.nn.softmax(logits_ref, axis=-1)
    zloss_ref = jnp.mean(jax.nn.logsumexp(logits_ref, axis=-1) ** 2)

    # Probs are written back in bf16 (perf) -> compare at bf16 precision.
    assert jnp.allclose(out["router_probs"], probs_ref, atol=1e-2), (
        "router_probs mismatch")
    assert jnp.allclose(out["router_z_loss"], zloss_ref,
                        rtol=1e-3, atol=1e-2), "router_z_loss mismatch"

    print("KERNEL_OK")
</pallas_src>

<mosaic_0001>
module attributes {stable_mosaic.version = 11 : i64} {
  func.func @kernel(%arg0: i32, %arg1: memref<16x32xf32, #tpu.memory_space<vmem>>, %arg2: memref<32x128xbf16, #tpu.memory_space<vmem>>, %arg3: memref<16x128xbf16, #tpu.memory_space<vmem>>, %arg4: memref<8x128xf32, #tpu.memory_space<vmem>>) attributes {dimension_semantics = [#tpu.dimension_semantics<parallel>], iteration_bounds = array<i64: 1>, scalar_prefetch = 0 : i64, scratch_operands = 0 : i64, tpu.core_type = #tpu.core_type<tc>, window_params = [{transform_indices = @transform_0, window_bounds = array<i64: 16, 32>}, {pipeline_mode = #tpu.pipeline_mode<synchronous>, transform_indices = @transform_1, window_bounds = array<i64: 32, 128>}, {transform_indices = @transform_2, window_bounds = array<i64: 16, 128>}, {transform_indices = @transform_3, window_bounds = array<i64: 8, 128>}]} {
    %c0 = arith.constant 0 : index
    %c0_0 = arith.constant 0 : index
    %0 = vector.load %arg1[%c0, %c0_0] : memref<16x32xf32, #tpu.memory_space<vmem>>, vector<16x32xf32>
    %1 = arith.truncf %0 : vector<16x32xf32> to vector<16x32xbf16>
    %c0_1 = arith.constant 0 : index
    %c0_2 = arith.constant 0 : index
    %2 = vector.load %arg2[%c0_1, %c0_2] : memref<32x128xbf16, #tpu.memory_space<vmem>>, vector<32x128xbf16>
    %cst = arith.constant dense<0.000000e+00> : vector<16x128xf32>
    %3 = tpu.matmul %1, %2, %cst {dimension_numbers = #tpu.dot_dimension_numbers<[1], [0], [0], [1], [0, 0, 1, 1], [], []>} : vector<16x32xbf16>, vector<32x128xbf16>, vector<16x128xf32> -> vector<16x128xf32>
    %4 = tpu.iota {dimensions = array<i32: 1>} : vector<1x128xi32>
    %c8_i32 = arith.constant 8 : i32
    %5 = vector.broadcast %c8_i32 : i32 to vector<1x128xi32>
    %6 = arith.cmpi slt, %4, %5 : vector<1x128xi32>
    %cst_3 = arith.constant -1.000000e+30 : f32
    %7 = vector.shape_cast %6 : vector<1x128xi1> to vector<1x128xi1>
    %8 = vector.broadcast %7 : vector<1x128xi1> to vector<16x128xi1>
    %9 = vector.broadcast %cst_3 : f32 to vector<16x128xf32>
    %10 = arith.select %8, %3, %9 : vector<16x128xi1>, vector<16x128xf32>
    %cst_4 = arith.constant dense<0xFF800000> : vector<16xf32>
    %11 = vector.multi_reduction <maximumf>, %10, %cst_4 [1] : vector<16x128xf32> to vector<16xf32>
    %12 = vector.shape_cast %11 : vector<16xf32> to vector<16x1xf32>
    %13 = vector.broadcast %12 : vector<16x1xf32> to vector<16x128xf32>
    %14 = arith.subf %10, %13 : vector<16x128xf32>
    %15 = math.exp %14 : vector<16x128xf32>
    %cst_5 = arith.constant dense<0.000000e+00> : vector<16xf32>
    %16 = vector.multi_reduction <add>, %15, %cst_5 [1] : vector<16x128xf32> to vector<16xf32>
    %17 = vector.shape_cast %16 : vector<16xf32> to vector<16x1xf32>
    %18 = vector.broadcast %17 : vector<16x1xf32> to vector<16x128xf32>
    %19 = arith.divf %15, %18 : vector<16x128xf32>
    %20 = arith.truncf %19 : vector<16x128xf32> to vector<16x128xbf16>
    %c0_6 = arith.constant 0 : index
    %c0_7 = arith.constant 0 : index
    %21 = vector.load %arg3[%c0_6, %c0_7] : memref<16x128xbf16, #tpu.memory_space<vmem>>, vector<16x128xbf16>
    tpu.vector_store %arg3[%c0_6, %c0_7], %20 {strides = array<i32>} : memref<16x128xbf16, #tpu.memory_space<vmem>>, vector<16x128xbf16>,
    %22 = math.log %17 : vector<16x1xf32>
    %23 = arith.addf %12, %22 : vector<16x1xf32>
    %24 = tpu.iota {dimensions = array<i32: 0>} : vector<16x1xi32>
    %c16_i32 = arith.constant 16 : i32
    %25 = arith.muli %arg0, %c16_i32 : i32
    %26 = vector.broadcast %25 : i32 to vector<16x1xi32>
    %27 = arith.addi %26, %24 : vector<16x1xi32>
    %c16_i32_8 = arith.constant 16 : i32
    %28 = vector.broadcast %c16_i32_8 : i32 to vector<16x1xi32>
    %29 = arith.cmpi slt, %27, %28 : vector<16x1xi32>
    %30 = arith.mulf %23, %23 : vector<16x1xf32>
    %cst_9 = arith.constant 0.000000e+00 : f32
    %31 = vector.broadcast %cst_9 : f32 to vector<16x1xf32>
    %32 = arith.select %29, %30, %31 : vector<16x1xi1>, vector<16x1xf32>
    %33 = vector.shape_cast %32 : vector<16x1xf32> to vector<1x16x1xf32>
    %cst_10 = arith.constant dense<0.000000e+00> : vector<1xf32>
    %34 = vector.multi_reduction <add>, %33, %cst_10 [1, 2] : vector<1x16x1xf32> to vector<1xf32>
    %35 = vector.shape_cast %34 : vector<1xf32> to vector<1x1x1xf32>
    %36 = vector.extract %35[0, 0, 0] : f32 from vector<1x1x1xf32>
    %37 = vector.broadcast %36 : f32 to vector<1x1xf32>
    %38 = tpu.iota {dimensions = array<i32: 0>} : vector<8x128xi32>
    %39 = tpu.iota {dimensions = array<i32: 1>} : vector<8x128xi32>
    %c0_i32 = arith.constant 0 : i32
    %40 = vector.broadcast %c0_i32 : i32 to vector<8x128xi32>
    %41 = arith.cmpi eq, %38, %40 : vector<8x128xi32>
    %c0_i32_11 = arith.constant 0 : i32
    %42 = vector.broadcast %c0_i32_11 : i32 to vector<8x128xi32>
    %43 = arith.cmpi eq, %39, %42 : vector<8x128xi32>
    %44 = arith.andi %41, %43 : vector<8x128xi1>
    %cst_12 = arith.constant 0.000000e+00 : f32
    %45 = vector.shape_cast %37 : vector<1x1xf32> to vector<1x1xf32>
    %46 = vector.broadcast %45 : vector<1x1xf32> to vector<8x128xf32>
    %47 = vector.broadcast %cst_12 : f32 to vector<8x128xf32>
    %48 = arith.select %44, %46, %47 : vector<8x128xi1>, vector<8x128xf32>
    %c0_13 = arith.constant 0 : index
    %c0_14 = arith.constant 0 : index
    %49 = vector.load %arg4[%c0_13, %c0_14] : memref<8x128xf32, #tpu.memory_space<vmem>>, vector<8x128xf32>
    tpu.vector_store %arg4[%c0_13, %c0_14], %48 {strides = array<i32>} : memref<8x128xf32, #tpu.memory_space<vmem>>, vector<8x128xf32>,
    return
  }
  func.func @transform_0(%arg0: i32) -> (i32, i32) {
    %c0_i32 = arith.constant 0 : i32
    %c0_i32_0 = arith.constant 0 : i32
    return %arg0, %c0_i32 : i32, i32
  }
  func.func @transform_1(%arg0: i32) -> (i32, i32) {
    %c0_i32 = arith.constant 0 : i32
    %c0_i32_0 = arith.constant 0 : i32
    %c0_i32_1 = arith.constant 0 : i32
    return %c0_i32, %c0_i32_0 : i32, i32
  }
  func.func @transform_2(%arg0: i32) -> (i32, i32) {
    %c0_i32 = arith.constant 0 : i32
    %c0_i32_0 = arith.constant 0 : i32
    return %arg0, %c0_i32 : i32, i32
  }
  func.func @transform_3(%arg0: i32) -> (i32, i32) {
    %c0_i32 = arith.constant 0 : i32
    %c0_i32_0 = arith.constant 0 : i32
    return %arg0, %c0_i32 : i32, i32
  }
}

</mosaic_0001>

<llo_original>
// kernel: tpu_custom_call.1
$region0: #{tpu_custom_call.1}
  #allocation0 [shape = 'u32[]', space=smem, size = 0x4, offset = 0x4, fixed_abs, tag = 'smem constant byte address 0x4 - core index']
  #allocation1 [shape = 'u32[144,128]{1,0:T(1,128)}', space=vmem, size = 0x12000, scoped, tag = 'internal scratch']
  %s0 = inlined_call_operand.hbm [shape: f32[16,32], index: 0, kind: input, shape index: {}]
  %s1 = inlined_call_operand.hbm [shape: bf16[32,128], index: 1, kind: input, shape index: {}]
  %s2 = inlined_call_operand.hbm [shape: bf16[16,128], index: 2, kind: output, shape index: {0}]
  %s3 = inlined_call_operand.hbm [shape: f32[8,128], index: 3, kind: output, shape index: {1}]
  %4 = xla_tuple %s2, %s3
  %s5 = sld [smem:[#allocation0]]
  $region34: #{tpu_custom_call.1} parent=0
    _
  %s7 = ssub.s32 1, %s5
  %s8 = scalar_select 0, %s7, %s5
  $region1: #{tpu_custom_call.1} parent=0
    #allocation2 [shape = 'u8[8192]{0}', space=vmem, size = 0x2000, scoped, tag = 'input window, operand 0, single buffered']
    #allocation3 [shape = 's32[1]{0}', space=sflag, size = 0x4, scoped, tag = 'scoped memory for tpu_custom_call.1']
    #allocation4 [shape = 's32[1]{0}', space=sflag, size = 0x4, scoped, tag = 'scoped memory for tpu_custom_call.1']
    #allocation5 [shape = 'u8[8192]{0}', space=vmem, size = 0x2000, scoped, tag = 'input window, operand 1, single buffered']
    #allocation6 [shape = 's32[1]{0}', space=sflag, size = 0x4, scoped, tag = 'scoped memory for tpu_custom_call.1']
    #allocation7 [shape = 'u8[4096]{0}', space=vmem, size = 0x1000, scoped, tag = 'output window, operand 0, single buffered']
    #allocation8 [shape = 'u8[4096]{0}', space=vmem, size = 0x1000, scoped, tag = 'output window, operand 1, single buffered']
    #allocation9 [shape = 's32[1]{0}', space=sflag, size = 0x4, scoped, tag = 'scoped memory for tpu_custom_call.1']
    %9 = vsyncpa [#allocation3], 0
    %10 = vsyncpa [#allocation6], 0
    %11 = vsyncpa [#allocation4], 0
    %12 = vsyncpa [#allocation9], 0
    // Predicated region
    $region2: #{tpu_custom_call.1} parent=1 // pred_check
      _
    $region3: #{tpu_custom_call.1} parent=1 // pred_check_branch
      %14 = sbr.rel (0) target = $region5
    $region4: #{tpu_custom_call.1} parent=1 // pred_region
      %s16 = ssub.s32 256, 256
      %17 = vsyncadd [#allocation3], %s16
      %s18 = sshll.u32 [#allocation2], 4
      %s19 = int_to_ptr.vmem [resolvable:$true] %s18
      %24 = dma.hbm_to_vmem [thread:$0]  %s0, 256, %s19, [#allocation3], 128, 128, 8
    $region5: #{tpu_custom_call.1} parent=1 // pred_fallthru
      _
    // Predicated region
    $region6: #{tpu_custom_call.1} parent=1 // pred_check
      _
    $region7: #{tpu_custom_call.1} parent=1 // pred_check_branch
      %26 = sbr.rel (0) target = $region9
    $region8: #{tpu_custom_call.1} parent=1 // pred_region
      %s28 = ssub.s32 256, 256
      %29 = vsyncadd [#allocation6], %s28
      %s30 = sshll.u32 [#allocation5], 4
      %s31 = int_to_ptr.vmem [resolvable:$true] %s30
      %36 = dma.hbm_to_vmem [thread:$0]  %s1, 256, %s31, [#allocation6], 64, 64, 4
    $region9: #{tpu_custom_call.1} parent=1 // pred_fallthru
      _
    // Predicated region
    $region10: #{tpu_custom_call.1} parent=1 // pred_check
      _
    $region11: #{tpu_custom_call.1} parent=1 // pred_check_branch
      %38 = sbr.rel (0) target = $region13
    $region12: #{tpu_custom_call.1} parent=1 // pred_region
      %39 = dma.done [#allocation3], 256
    $region13: #{tpu_custom_call.1} parent=1 // pred_fallthru
      _
    // Predicated region
    $region14: #{tpu_custom_call.1} parent=1 // pred_check
      _
    $region15: #{tpu_custom_call.1} parent=1 // pred_check_branch
      %41 = sbr.rel (0) target = $region17
    $region16: #{tpu_custom_call.1} parent=1 // pred_region
      %42 = dma.done [#allocation6], 256
    $region17: #{tpu_custom_call.1} parent=1 // pred_fallthru
      _
    %v44 = vld [vmem:[#allocation2] sm:$0xff]
    %v45 = vld [vmem:[#allocation2 + $0x8] sm:$0xff]
    %v46 = vpack.c.bf16 %v45, %v44
    %v47 = vld [vmem:[#allocation5] sm:$0xf]
    %v48 = vld [vmem:[#allocation5 + $0x4] sm:$0xf]
    %v49 = vld [vmem:[#allocation5 + $0x8] sm:$0xf]
    %v50 = vld [vmem:[#allocation5 + $0xc] sm:$0xf]
    %v55 = vunpack.c.l.b16 %v47
    %v56 = vunpack.c.l.b16 %v48
    %v57 = vunpack.c.l.b16 %v49
    %v58 = vunpack.c.l.b16 %v50
    %v59 = vpack.c.b16 %v56, %v55
    %v60 = vpack.c.b16 %v58, %v57
    %vm63 = vcmask 261120
    %v65 = vsel %vm63, %v46, 0
    %67 = vmatprep.subr.bf16.mxu0 0
    %68 = vmatpush1.bf16.msra.mxu0 0
    %69 = vmatprep.subr.bf16.mxu0 0
    %70 = vmatpush1.bf16.msra.mxu0 0
    %71 = vmatprep.subr.bf16.mxu0 0
    %72 = vmatpush1.bf16.msra.mxu0 0
    %73 = vmatprep.subr.bf16.mxu0 0
    %74 = vmatpush1.bf16.msra.mxu0 0
    %75 = vmatprep.subr.bf16.mxu0 0
    %76 = vmatpush1.bf16.msra.mxu0 0
    %77 = vmatprep.subr.bf16.mxu0 0
    %78 = vmatpush1.bf16.msra.mxu0 0
    %79 = vmatprep.subr.bf16.mxu0 0
    %80 = vmatpush1.bf16.msra.mxu0 %v60
    %81 = vmatprep.subr.bf16.mxu0 0
    %82 = vmatpush1.bf16.msra.mxu0 %v59
    %83 = vmatprep.subr.bf16.mxu0 0
    %84 = vmatpush2.bf16.msra.mxu0 0
    %85 = vmatprep.subr.bf16.mxu0 0
    %86 = vmatpush2.bf16.msra.mxu0 0
    %87 = vmatprep.subr.bf16.mxu0 0
    %88 = vmatpush2.bf16.msra.mxu0 0
    %89 = vmatprep.subr.bf16.mxu0 0
    %90 = vmatpush2.bf16.msra.mxu0 0
    %91 = vmatprep.subr.bf16.mxu0 0
    %92 = vmatpush2.bf16.msra.mxu0 0
    %93 = vmatprep.subr.bf16.mxu0 0
    %94 = vmatpush2.bf16.msra.mxu0 0
    %95 = vmatprep.subr.bf16.mxu0 0
    %96 = vmatpush2.bf16.msra.mxu0 0
    %97 = vmatprep.subr.bf16.mxu0 0
    %98 = vmatpush2.bf16.msra.mxu0 0
    %99 = vmatprep.mubr.bf16.mxu0 0
    %100 = vmatmul.mubr.bf16.gmra.mxu0 %v65
    %v101 = vpop.f32.mrf.mxu0
    %v102 = vadd.f32 0.0, %v101
    %v103 = vpop.f32.mrf.mxu0
    %v104 = vpop.f32.mrf.mxu0
    %v105 = vadd.f32 0.0, %v104
    %v106 = vpop.f32.mrf.mxu0
    %107 = vdwg.mxu0
    %v108 = vlaneseq
    %v109 = vand.u32 %v108, 127
    %vm110 = vcmp.lt.s32.totalorder %v109, 8
    %v111 = vsel %vm110, 1, 0
    %vm112 = vcmp.eq.s32.totalorder %v111, 1
    %v113 = vsel %vm112, %v102, -1e+30
    %v114 = vsel %vm112, %v105, -1e+30
    %115 = vmax.xlane.f32.xlu0 %v113
    %v116 = vpop.xlane.xlu0 %115
    %117 = vmax.xlane.f32.xlu0 %v114
    %v118 = vpop.xlane.xlu0 %117
    %v119 = vsub.f32 %v113, %v116
    %v120 = vsub.f32 %v114, %v118
    %v121 = vmul.f32 %v119, 1.442695
    %v122 = vpow.pop %v121
    %v123 = vmul.f32 %v120, 1.442695
    %v124 = vpow.pop %v123
    %125 = vadd.xlane.f32.xlu0 %v122
    %v126 = vpop.xlane.xlu0 %125
    %127 = vadd.xlane.f32.xlu0 %v124
    %v128 = vpop.xlane.xlu0 %127
    %v129 = vrcp.pop %v126
    %v130 = vmul.f32 %v122, %v129
    %v131 = vrcp.pop %v128
    %v132 = vmul.f32 %v124, %v131
    %v133 = vpack.c.bf16 %v132, %v130
    %v135 = vunpack.c.l.b16 %v133
    %v136 = vunpack.c.h.b16 %v133
    %v137 = vpack.c.b16 %v135, %v135
    %v138 = vpack.c.b16 %v136, %v136
    %141 = vst [vmem:[#allocation7] sm:$0xf] %v137
    %142 = vst [vmem:[#allocation7 + $0x4] sm:$0xf] %v138
    %v143 = vlog2.pop %v126
    %v144 = vmul.f32 %v143, 0.6931472
    %v145 = vlog2.pop %v128
    %v146 = vmul.f32 %v145, 0.6931472
    %v147 = vadd.f32 %v116, %v144
    %v148 = vadd.f32 %v118, %v146
    %v149 = vlaneseq
    %v150 = vshrl.u32 %v149, 7
    %v151 = vadd.s32 %v150, 8
    %s152 = smul.u32 0, 16
    %v153 = vstv %s152
    %v154 = vadd.s32 %v153, %v150
    %v155 = vadd.s32 %v153, %v151
    %vm156 = vcmp.lt.s32.totalorder %v154, 16
    %vm157 = vcmp.lt.s32.totalorder %v155, 16
    %v158 = vmul.f32 %v147, %v147
    %v159 = vmul.f32 %v148, %v148
    %v160 = vsel %vm156, %v158, 0.0
    %v161 = vsel %vm157, %v159, 0.0
    %vm162 = vcmask 7168
    %v163 = vsel %vm162, %v160, 0.0
    %v164 = vsel %vm162, %v161, 0.0
    %v165 = vadd.f32 %v163, %v164
    %166 = vadd.xlane.f32.xlu0 %v165
    %v167 = vpop.xlane.xlu0 %166
    %v168 = vrot.slane %v167, 4
    %v169 = vadd.f32 %v167, %v168
    %v170 = vrot.slane %v169, 2
    %v171 = vadd.f32 %v169, %v170
    %v172 = vrot.slane %v171, 1
    %v173 = vadd.f32 %v171, %v172
    %s174 = vtos %v173
    %vm175 = vcmp.eq.s32.totalorder %v150, 0
    %vm176 = vcmp.eq.s32.totalorder %v109, 0
    %vm177 = vmand %vm175, %vm176
    %v178 = vstv %s174
    %v179 = vsel %vm177, %v178, 0.0
    %180 = vst [vmem:[#allocation8] sm:$0xff] %v179
    // Predicated region
    $region18: #{tpu_custom_call.1} parent=1 // pred_check
      _
    $region19: #{tpu_custom_call.1} parent=1 // pred_check_branch
      %182 = sbr.rel (0) target = $region21
    $region20: #{tpu_custom_call.1} parent=1 // pred_region
      %s184 = ssub.s32 128, 128
      %185 = vsyncadd [#allocation4], %s184
      %s186 = sshll.u32 [#allocation7], 4
      %s187 = int_to_ptr.vmem [resolvable:$true] %s186
      %192 = dma.vmem_to_hbm [thread:$0]  %s187, 128, %s2, [#allocation4], 64, 64, 4
    $region21: #{tpu_custom_call.1} parent=1 // pred_fallthru
      _
    // Predicated region
    $region22: #{tpu_custom_call.1} parent=1 // pred_check
      _
    $region23: #{tpu_custom_call.1} parent=1 // pred_check_branch
      %194 = sbr.rel (0) target = $region25
    $region24: #{tpu_custom_call.1} parent=1 // pred_region
      %s196 = ssub.s32 128, 128
      %197 = vsyncadd [#allocation9], %s196
      %s199 = sshll.u32 [#allocation8], 4
      %s200 = int_to_ptr.vmem [resolvable:$true] %s199
      %202 = dma.vmem_to_hbm [thread:$0]  %s200, 128, %s3, [#allocation9]
    $region25: #{tpu_custom_call.1} parent=1 // pred_fallthru
      _
    // Predicated region
    $region26: #{tpu_custom_call.1} parent=1 // pred_check
      _
    $region27: #{tpu_custom_call.1} parent=1 // pred_check_branch
      %204 = sbr.rel (0) target = $region29
    $region28: #{tpu_custom_call.1} parent=1 // pred_region
      %205 = dma.done [#allocation4], 128
    $region29: #{tpu_custom_call.1} parent=1 // pred_fallthru
      _
    // Predicated region
    $region30: #{tpu_custom_call.1} parent=1 // pred_check
      _
    $region31: #{tpu_custom_call.1} parent=1 // pred_check_branch
      %207 = sbr.rel (0) target = $region33
    $region32: #{tpu_custom_call.1} parent=1 // pred_region
      %208 = dma.done [#allocation9], 128
    $region33: #{tpu_custom_call.1} parent=1 // pred_fallthru
      _
    %209 = vsyncpa [#allocation3], 1
    %210 = vsyncpa [#allocation6], 1
    %211 = vsyncpa [#allocation4], 1
    %212 = vsyncpa [#allocation9], 1

</llo_original>
